<compile_context>
chip_gen: v7x
topology: tpu7x:2x2x1
jax: 0.10.0
libtpu: 0.0.40
codegen_flags: <defaults>
</compile_context>

<pallas_src>
import jax
import jax.numpy as jnp
from jax.experimental import pallas as pl
from jax.experimental.pallas import tpu as pltpu


def policy_kernel(x_ref, w1_ref, b1_ref, w2d_ref, b2d_ref, o_ref):
    # x_ref  : (S, TILE_B)  states, batch on the lane axis
    # w1_ref : (H, S)       fc1 weight (PyTorch layout)
    # b1_ref : (H, 1)       fc1 bias as a column (lane-broadcast)
    # w2d_ref: (H, 1)       fc2 weight difference (w2[1] - w2[0]) as a column
    # b2d_ref: (1,)         fc2 bias difference (b2[1] - b2[0]) in SMEM
    # o_ref  : (A, TILE_B)  action probabilities, lane-dense (A == 2)

    # fc1 on the MXU: (H, S) @ (S, TILE_B) -> (H, TILE_B); bias + ReLU on the VPU.
    h = jnp.dot(w1_ref[...], x_ref[...], preferred_element_type=jnp.float32)
    h = jnp.maximum(h + b1_ref[...], 0.0)

    # fc2 folded into a single logit-difference reduction (VPU mul + sublane sum),
    # then 2-way softmax == sigmoid of the logit difference (one EUP op).
    d = jnp.sum(w2d_ref[...] * h, axis=0, keepdims=True) + b2d_ref[0]  # (1, TILE_B)
    p1 = jax.nn.sigmoid(d)
    o_ref[0:1, :] = 1.0 - p1
    o_ref[1:2, :] = p1
    # NOTE: p0 = 1 - p1 loses relative precision as p1 -> 1; if downstream code
    # needs log-probs, compute them via log-sigmoid rather than log(kernel output).


def _choose_tile(batch, tile_b_max):
    """Pick a 128-aligned batch tile and the padded batch size.

    Heuristic: tile ~= half the (128-aligned) padded batch, capped by
    tile_b_max, so mid/large batches get >= 2 grid steps (keeps both v7x
    TensorCores busy) while each step carries a large, DMA-efficient payload.
    """
    tile_b_max = max(128, pl.cdiv(int(tile_b_max), 128) * 128)
    b128 = max(128, pl.cdiv(batch, 128) * 128)
    if b128 <= 128:
        tile = 128
    else:
        half = pl.cdiv(pl.cdiv(b128, 2), 128) * 128
        tile = min(tile_b_max, half)
    b_pad = pl.cdiv(batch, tile) * tile
    return tile, b_pad


def policy_forward(state, w1, b1, w2, b2, tile_b=16384):
    """Forward pass of Policy.

    state: (B, S) f32.  Params in PyTorch nn.Linear layout:
      w1 (H, S), b1 (H,), w2 (A, H), b2 (A,)  with A == 2.
    Returns (B, A) action probabilities.
    """
    B, S = state.shape
    H = w1.shape[0]
    A = w2.shape[0]
    assert A == 2, "sigmoid-identity softmax assumes exactly 2 actions"

    tile, b_pad = _choose_tile(B, tile_b)

    # Lane-dense layout: batch last, zero-padded to the tiled extent in one op.
    x_t = jnp.pad(state.T, ((0, 0), (0, b_pad - B)))            # (S, b_pad)
    b1_col = b1.reshape(H, 1)
    w2_diff = (w2[1] - w2[0]).reshape(H, 1)                     # (H, 1)
    b2_diff = (b2[1] - b2[0]).reshape(1)                        # (1,) SMEM scalar

    # VMEM budget: double-buffered x block (padded to 8 sublanes) + double-
    # buffered out block + the (H, tile) f32 intermediate, plus margin.
    vmem_budget = 2 * (8 * tile * 4) + 2 * (8 * tile * 4) + H * tile * 4 + (2 << 20)
    vmem_limit = int(min(64 * 2**20, max(32 * 2**20, vmem_budget)))

    out_t = pl.pallas_call(
        policy_kernel,
        out_shape=jax.ShapeDtypeStruct((A, b_pad), jnp.float32),
        grid=(b_pad // tile,),
        in_specs=[
            pl.BlockSpec((S, tile), lambda i: (0, i)),            # states, batch-tiled
            pl.BlockSpec((H, S), lambda i: (0, 0)),               # w1, VMEM-resident
            pl.BlockSpec((H, 1), lambda i: (0, 0)),               # b1 column
            pl.BlockSpec((H, 1), lambda i: (0, 0)),               # w2 diff column
            pl.BlockSpec(memory_space=pltpu.MemorySpace.SMEM),    # b2 diff scalar
        ],
        out_specs=pl.BlockSpec((A, tile), lambda i: (0, i)),
        compiler_params=pltpu.CompilerParams(
            dimension_semantics=("parallel",),
            vmem_limit_bytes=vmem_limit),
    )(x_t, w1, b1_col, w2_diff, b2_diff)

    return out_t[:, :B].T


def init_params(key, state_size=4, action_size=2, hidden_size=32):
    """Deterministic init mimicking nn.Linear's U(-1/sqrt(fan_in), 1/sqrt(fan_in)),
    stored in PyTorch layout (out_features, in_features)."""
    k1, k2, k3, k4 = jax.random.split(key, 4)
    bound1 = 1.0 / jnp.sqrt(state_size)
    bound2 = 1.0 / jnp.sqrt(hidden_size)
    w1 = jax.random.uniform(k1, (hidden_size, state_size), jnp.float32, -bound1, bound1)
    b1 = jax.random.uniform(k2, (hidden_size,), jnp.float32, -bound1, bound1)
    w2 = jax.random.uniform(k3, (action_size, hidden_size), jnp.float32, -bound2, bound2)
    b2 = jax.random.uniform(k4, (action_size,), jnp.float32, -bound2, bound2)
    return w1, b1, w2, b2


def _reference(state, w1, b1, w2, b2):
    h = jnp.maximum(state @ w1.T + b1, 0.0)
    logits = h @ w2.T + b2
    return jax.nn.softmax(logits, axis=-1)


if __name__ == "__main__":
    key = jax.random.PRNGKey(0)
    pkey, xkey, xkey2 = jax.random.split(key, 3)

    state_size, action_size, hidden_size = 4, 2, 32
    w1, b1, w2, b2 = init_params(pkey, state_size, action_size, hidden_size)

    # Small case matching the RL rollout (batch=2) — single 128-lane tile.
    batch = 2
    state = jax.random.normal(xkey, (batch, state_size), jnp.float32)
    probs = jax.block_until_ready(policy_forward(state, w1, b1, w2, b2))
    probs_ref = _reference(state, w1, b1, w2, b2)
    assert probs.shape == (batch, action_size)
    assert jnp.allclose(probs, probs_ref, atol=1e-5), "mismatch vs reference (B=2)"
    assert jnp.allclose(jnp.sum(probs, axis=-1), 1.0, atol=1e-5)

    # Larger, non-multiple batch exercises padding and the >=2-step grid path.
    batch2 = 600
    state2 = jax.random.normal(xkey2, (batch2, state_size), jnp.float32)
    probs2 = jax.block_until_ready(policy_forward(state2, w1, b1, w2, b2))
    probs2_ref = _reference(state2, w1, b1, w2, b2)
    assert probs2.shape == (batch2, action_size)
    assert jnp.allclose(probs2, probs2_ref, atol=1e-5), "mismatch vs reference (B=600)"
    assert jnp.allclose(jnp.sum(probs2, axis=-1), 1.0, atol=1e-5)

    # TODO(synk): Policy.act's Categorical sampling / log_prob is host-side RL
    # plumbing, not part of the module's forward pass, and is left out.
    print("KERNEL_OK")
</pallas_src>

<mosaic_0001>
module attributes {stable_mosaic.version = 11 : i64} {
  func.func @policy_kernel(%arg0: i32, %arg1: memref<4x128xf32, #tpu.memory_space<vmem>>, %arg2: memref<32x4xf32, #tpu.memory_space<vmem>>, %arg3: memref<32x1xf32, #tpu.memory_space<vmem>>, %arg4: memref<32x1xf32, #tpu.memory_space<vmem>>, %arg5: memref<1xf32, #tpu.memory_space<smem>>, %arg6: memref<2x128xf32, #tpu.memory_space<vmem>>) attributes {dimension_semantics = [#tpu.dimension_semantics<parallel>], iteration_bounds = array<i64: 1>, scalar_prefetch = 0 : i64, scratch_operands = 0 : i64, tpu.core_type = #tpu.core_type<tc>, window_params = [{transform_indices = @transform_0, window_bounds = array<i64: 4, 128>}, {pipeline_mode = #tpu.pipeline_mode<synchronous>, transform_indices = @transform_1, window_bounds = array<i64: 32, 4>}, {pipeline_mode = #tpu.pipeline_mode<synchronous>, transform_indices = @transform_2, window_bounds = array<i64: 32, 1>}, {pipeline_mode = #tpu.pipeline_mode<synchronous>, transform_indices = @transform_3, window_bounds = array<i64: 32, 1>}, {transform_indices = @transform_4, window_bounds = array<i64: 1>}, {transform_indices = @transform_5, window_bounds = array<i64: 2, 128>}]} {
    %c0 = arith.constant 0 : index
    %c0_0 = arith.constant 0 : index
    %0 = vector.load %arg2[%c0, %c0_0] : memref<32x4xf32, #tpu.memory_space<vmem>>, vector<32x4xf32>
    %c0_1 = arith.constant 0 : index
    %c0_2 = arith.constant 0 : index
    %1 = vector.load %arg1[%c0_1, %c0_2] : memref<4x128xf32, #tpu.memory_space<vmem>>, vector<4x128xf32>
    %cst = arith.constant dense<0.000000e+00> : vector<32x128xf32>
    %2 = tpu.matmul %0, %1, %cst {dimension_numbers = #tpu.dot_dimension_numbers<[1], [0], [0], [1], [0, 0, 1, 1], [], []>} : vector<32x4xf32>, vector<4x128xf32>, vector<32x128xf32> -> vector<32x128xf32>
    %c0_3 = arith.constant 0 : index
    %c0_4 = arith.constant 0 : index
    %3 = vector.load %arg3[%c0_3, %c0_4] : memref<32x1xf32, #tpu.memory_space<vmem>>, vector<32x1xf32>
    %4 = vector.broadcast %3 : vector<32x1xf32> to vector<32x128xf32>
    %5 = arith.addf %2, %4 : vector<32x128xf32>
    %cst_5 = arith.constant 0.000000e+00 : f32
    %6 = vector.broadcast %cst_5 : f32 to vector<32x128xf32>
    %7 = arith.maximumf %5, %6 : vector<32x128xf32>
    %c0_6 = arith.constant 0 : index
    %c0_7 = arith.constant 0 : index
    %8 = vector.load %arg4[%c0_6, %c0_7] : memref<32x1xf32, #tpu.memory_space<vmem>>, vector<32x1xf32>
    %9 = vector.broadcast %8 : vector<32x1xf32> to vector<32x128xf32>
    %10 = arith.mulf %9, %7 : vector<32x128xf32>
    %cst_8 = arith.constant dense<0.000000e+00> : vector<128xf32>
    %11 = vector.multi_reduction <add>, %10, %cst_8 [0] : vector<32x128xf32> to vector<128xf32>
    %12 = vector.shape_cast %11 : vector<128xf32> to vector<1x128xf32>
    %c0_9 = arith.constant 0 : index
    %13 = memref.load %arg5[%c0_9] : memref<1xf32, #tpu.memory_space<smem>>
    %14 = vector.broadcast %13 : f32 to vector<1x128xf32>
    %15 = arith.addf %12, %14 : vector<1x128xf32>
    %16 = arith.negf %15 : vector<1x128xf32>
    %17 = math.exp %16 : vector<1x128xf32>
    %cst_10 = arith.constant 1.000000e+00 : f32
    %18 = vector.broadcast %cst_10 : f32 to vector<1x128xf32>
    %19 = arith.addf %18, %17 : vector<1x128xf32>
    %20 = arith.divf %18, %19 : vector<1x128xf32>
    %cst_11 = arith.constant 1.000000e+00 : f32
    %21 = vector.broadcast %cst_11 : f32 to vector<1x128xf32>
    %22 = arith.subf %21, %20 : vector<1x128xf32>
    %c0_12 = arith.constant 0 : index
    %c0_13 = arith.constant 0 : index
    %23 = vector.load %arg6[%c0_12, %c0_13] : memref<2x128xf32, #tpu.memory_space<vmem>>, vector<1x128xf32>
    tpu.vector_store %arg6[%c0_12, %c0_13], %22 {strides = array<i32>} : memref<2x128xf32, #tpu.memory_space<vmem>>, vector<1x128xf32>,
    %c1 = arith.constant 1 : index
    %c0_14 = arith.constant 0 : index
    %24 = vector.load %arg6[%c1, %c0_14] : memref<2x128xf32, #tpu.memory_space<vmem>>, vector<1x128xf32>
    tpu.vector_store %arg6[%c1, %c0_14], %20 {strides = array<i32>} : memref<2x128xf32, #tpu.memory_space<vmem>>, vector<1x128xf32>,
    return
  }
  func.func @transform_0(%arg0: i32) -> (i32, i32) {
    %c0_i32 = arith.constant 0 : i32
    %c0_i32_0 = arith.constant 0 : i32
    return %c0_i32, %arg0 : i32, i32
  }
  func.func @transform_1(%arg0: i32) -> (i32, i32) {
    %c0_i32 = arith.constant 0 : i32
    %c0_i32_0 = arith.constant 0 : i32
    %c0_i32_1 = arith.constant 0 : i32
    return %c0_i32, %c0_i32_0 : i32, i32
  }
  func.func @transform_2(%arg0: i32) -> (i32, i32) {
    %c0_i32 = arith.constant 0 : i32
    %c0_i32_0 = arith.constant 0 : i32
    %c0_i32_1 = arith.constant 0 : i32
    return %c0_i32, %c0_i32_0 : i32, i32
  }
  func.func @transform_3(%arg0: i32) -> (i32, i32) {
    %c0_i32 = arith.constant 0 : i32
    %c0_i32_0 = arith.constant 0 : i32
    %c0_i32_1 = arith.constant 0 : i32
    return %c0_i32, %c0_i32_0 : i32, i32
  }
  func.func @transform_4(%arg0: i32) -> i32 {
    %c0_i32 = arith.constant 0 : i32
    %c0_i32_0 = arith.constant 0 : i32
    return %c0_i32 : i32
  }
  func.func @transform_5(%arg0: i32) -> (i32, i32) {
    %c0_i32 = arith.constant 0 : i32
    %c0_i32_0 = arith.constant 0 : i32
    return %c0_i32, %arg0 : i32, i32
  }
}

</mosaic_0001>

<llo_original>
// kernel: tpu_custom_call.1
$region0: #{tpu_custom_call.1}
  #allocation0 [shape = 'u32[]', space=smem, size = 0x4, offset = 0x4, fixed_abs, tag = 'smem constant byte address 0x4 - core index']
  #allocation1 [shape = 'u32[144,128]{1,0:T(1,128)}', space=vmem, size = 0x12000, scoped, tag = 'internal scratch']
  #allocation2 [shape = 'f32[1]{0:T(128)S(6)}', space=smem, size = 0x200, scoped, tag = 'scoped memory for tpu_custom_call.1']
  %s0 = inlined_call_operand.vmem [shape: f32[4,128], index: 0, kind: input, shape index: {}]
  %s1 = inlined_call_operand.vmem [shape: f32[32,4], index: 1, kind: input, shape index: {}]
  %s2 = inlined_call_operand.vmem [shape: f32[32,1], index: 2, kind: input, shape index: {}]
  %s3 = inlined_call_operand.vmem [shape: f32[32,1], index: 3, kind: input, shape index: {}]
  %s4 = inlined_call_operand.<no memory space> [shape: f32[1], index: 4, kind: input, shape index: {}]
  %s5 = inlined_call_operand.hbm [shape: f32[2,128], index: 5, kind: output, shape index: {}]
  %s6 = sld [smem:[#allocation0]]
  $region30: #{tpu_custom_call.1} parent=0
    _
  %s8 = ssub.s32 1, %s6
  %s9 = scalar_select 0, %s8, %s6
  %10 = sst [smem:[#allocation2]] %s4
  $region1: #{tpu_custom_call.1} parent=0
    #allocation3 [shape = 'u8[1024]{0}', space=vmem, size = 0x400, scoped, tag = 'output window, operand 0, single buffered']
    #allocation4 [shape = 's32[1]{0}', space=sflag, size = 0x4, scoped, tag = 'scoped memory for tpu_custom_call.1']
    %11 = vsyncpa [#allocation4], 0
    // Predicated region
    $region2: #{tpu_custom_call.1} parent=1 // pred_check
      _
    $region3: #{tpu_custom_call.1} parent=1 // pred_check_branch
      %13 = sbr.rel (0) target = $region5
    $region4: #{tpu_custom_call.1} parent=1 // pred_region
      _
    $region5: #{tpu_custom_call.1} parent=1 // pred_fallthru
      _
    // Predicated region
    $region6: #{tpu_custom_call.1} parent=1 // pred_check
      _
    $region7: #{tpu_custom_call.1} parent=1 // pred_check_branch
      %15 = sbr.rel (0) target = $region9
    $region8: #{tpu_custom_call.1} parent=1 // pred_region
      _
    $region9: #{tpu_custom_call.1} parent=1 // pred_fallthru
      _
    // Predicated region
    $region10: #{tpu_custom_call.1} parent=1 // pred_check
      _
    $region11: #{tpu_custom_call.1} parent=1 // pred_check_branch
      %17 = sbr.rel (0) target = $region13
    $region12: #{tpu_custom_call.1} parent=1 // pred_region
      _
    $region13: #{tpu_custom_call.1} parent=1 // pred_fallthru
      _
    // Predicated region
    $region14: #{tpu_custom_call.1} parent=1 // pred_check
      _
    $region15: #{tpu_custom_call.1} parent=1 // pred_check_branch
      %19 = sbr.rel (0) target = $region17
    $region16: #{tpu_custom_call.1} parent=1 // pred_region
      _
    $region17: #{tpu_custom_call.1} parent=1 // pred_fallthru
      _
    // Predicated region
    $region18: #{tpu_custom_call.1} parent=1 // pred_check
      _
    $region19: #{tpu_custom_call.1} parent=1 // pred_check_branch
      %21 = sbr.rel (0) target = $region21
    $region20: #{tpu_custom_call.1} parent=1 // pred_region
      _
    $region21: #{tpu_custom_call.1} parent=1 // pred_fallthru
      _
    %v22 = vld [vmem:[%s1] sm:$0xff]
    %v23 = vld [vmem:[%s1 + $0x8] sm:$0xff]
    %v24 = vld [vmem:[%s1 + $0x10] sm:$0xff]
    %v25 = vld [vmem:[%s1 + $0x18] sm:$0xff]
    %v26 = vld [vmem:[%s0] sm:$0xf]
    %v27 = vld [vmem:[%s2] sm:$0xff]
    %v28 = vld [vmem:[%s2 + $0x8] sm:$0xff]
    %v29 = vld [vmem:[%s2 + $0x10] sm:$0xff]
    %v30 = vld [vmem:[%s2 + $0x18] sm:$0xff]
    %32 = vset.pattern.permute.xlu0 0
    %33 = vperm.xlu0 %32, %v27
    %v34 = vpop.permute.xlu0 %33
    %37 = vset.pattern.permute.xlu0 0
    %38 = vperm.xlu0 %37, %v28
    %v39 = vpop.permute.xlu0 %38
    %42 = vset.pattern.permute.xlu0 0
    %43 = vperm.xlu0 %42, %v29
    %v44 = vpop.permute.xlu0 %43
    %47 = vset.pattern.permute.xlu0 0
    %48 = vperm.xlu0 %47, %v30
    %v49 = vpop.permute.xlu0 %48
    %vm51 = vcmask 31744
    %v53 = vsel %vm51, %v22, 0
    %v56 = vsel %vm51, %v23, 0
    %v59 = vsel %vm51, %v24, 0
    %v62 = vsel %vm51, %v25, 0
    %vm64 = vcmask 1043456
    %v66 = vsel %vm64, %v26, 0
    %68 = vmatprep.subr.mxu0 0.0
    %69 = vmatpush1.msra.mxu0 %v66
    %70 = vmatprep.subr.mxu0 0.0
    %71 = vmatpush1.msra.mxu0 0.0
    %72 = vmatprep.subr.mxu0 0.0
    %73 = vmatpush1.msra.mxu0 0.0
    %74 = vmatprep.subr.mxu0 0.0
    %75 = vmatpush1.msra.mxu0 0.0
    %76 = vmatprep.subr.mxu0 0.0
    %77 = vmatpush1.msra.mxu0 0.0
    %78 = vmatprep.subr.mxu0 0.0
    %79 = vmatpush1.msra.mxu0 0.0
    %80 = vmatprep.subr.mxu0 0.0
    %81 = vmatpush1.msra.mxu0 0.0
    %82 = vmatprep.subr.mxu0 0.0
    %83 = vmatpush1.msra.mxu0 0.0
    %84 = vmatprep.subr.mxu0 0.0
    %85 = vmatpush1.msra.mxu0 0.0
    %86 = vmatprep.subr.mxu0 0.0
    %87 = vmatpush1.msra.mxu0 0.0
    %88 = vmatprep.subr.mxu0 0.0
    %89 = vmatpush1.msra.mxu0 0.0
    %90 = vmatprep.subr.mxu0 0.0
    %91 = vmatpush1.msra.mxu0 0.0
    %92 = vmatprep.subr.mxu0 0.0
    %93 = vmatpush1.msra.mxu0 0.0
    %94 = vmatprep.subr.mxu0 0.0
    %95 = vmatpush1.msra.mxu0 0.0
    %96 = vmatprep.subr.mxu0 0.0
    %97 = vmatpush1.msra.mxu0 0.0
    %98 = vmatprep.subr.mxu0 0.0
    %99 = vmatpush1.msra.mxu0 0.0
    %100 = vmatprep.subr.mxu0 0.0
    %101 = vmatpush1.msra.mxu0 0.0
    %102 = vmatprep.subr.mxu0 0.0
    %103 = vmatpush1.msra.mxu0 0.0
    %104 = vmatprep.subr.mxu0 0.0
    %105 = vmatpush1.msra.mxu0 0.0
    %106 = vmatprep.subr.mxu0 0.0
    %107 = vmatpush1.msra.mxu0 0.0
    %108 = vmatprep.subr.mxu0 0.0
    %109 = vmatpush1.msra.mxu0 0.0
    %110 = vmatprep.subr.mxu0 0.0
    %111 = vmatpush1.msra.mxu0 0.0
    %112 = vmatprep.subr.mxu0 0.0
    %113 = vmatpush1.msra.mxu0 0.0
    %114 = vmatprep.subr.mxu0 0.0
    %115 = vmatpush1.msra.mxu0 0.0
    %116 = vmatprep.subr.mxu0 0.0
    %117 = vmatpush1.msra.mxu0 0.0
    %118 = vmatprep.subr.mxu0 0.0
    %119 = vmatpush1.msra.mxu0 0.0
    %120 = vmatprep.subr.mxu0 0.0
    %121 = vmatpush1.msra.mxu0 0.0
    %122 = vmatprep.subr.mxu0 0.0
    %123 = vmatpush1.msra.mxu0 0.0
    %124 = vmatprep.subr.mxu0 0.0
    %125 = vmatpush1.msra.mxu0 0.0
    %126 = vmatprep.subr.mxu0 0.0
    %127 = vmatpush1.msra.mxu0 0.0
    %128 = vmatprep.subr.mxu0 0.0
    %129 = vmatpush1.msra.mxu0 0.0
    %130 = vmatprep.subr.mxu0 0.0
    %131 = vmatpush1.msra.mxu0 0.0
    %132 = vmatprep.mubr.f32.mxu0 0.0
    %133 = vmatmul.mubr.f32.gmra.mrb[0].mxu0 %v53
    %v134 = vpop.f32.mrb[0].mxu0
    %v135 = vadd.f32 %v34, %v134
    %v136 = vpop.f32.mrb[0].mxu0
    %137 = vmatprep.mubr.f32.mxu0 0.0
    %138 = vmatmul.mubr.f32.gmra.mrb[0].mxu0 %v56
    %v139 = vpop.f32.mrb[0].mxu0
    %v140 = vadd.f32 %v39, %v139
    %v141 = vpop.f32.mrb[0].mxu0
    %142 = vmatprep.mubr.f32.mxu0 0.0
    %143 = vmatmul.mubr.f32.gmra.mrb[0].mxu0 %v59
    %v144 = vpop.f32.mrb[0].mxu0
    %v145 = vadd.f32 %v44, %v144
    %v146 = vpop.f32.mrb[0].mxu0
    %147 = vmatprep.mubr.f32.mxu0 0.0
    %148 = vmatmul.mubr.f32.gmra.mrb[0].mxu0 %v62
    %v149 = vpop.f32.mrb[0].mxu0
    %v150 = vadd.f32 %v49, %v149
    %v151 = vpop.f32.mrb[0].mxu0
    %152 = vdwg.mxu0
    %v153 = vmax.f32 %v135, 0.0
    %v154 = vmax.f32 %v140, 0.0
    %v155 = vmax.f32 %v145, 0.0
    %v156 = vmax.f32 %v150, 0.0
    %v157 = vld [vmem:[%s3] sm:$0xff]
    %v158 = vld [vmem:[%s3 + $0x8] sm:$0xff]
    %v159 = vld [vmem:[%s3 + $0x10] sm:$0xff]
    %v160 = vld [vmem:[%s3 + $0x18] sm:$0xff]
    %162 = vset.pattern.permute.xlu0 0
    %163 = vperm.xlu0 %162, %v157
    %v164 = vpop.permute.xlu0 %163
    %167 = vset.pattern.permute.xlu0 0
    %168 = vperm.xlu0 %167, %v158
    %v169 = vpop.permute.xlu0 %168
    %172 = vset.pattern.permute.xlu0 0
    %173 = vperm.xlu0 %172, %v159
    %v174 = vpop.permute.xlu0 %173
    %177 = vset.pattern.permute.xlu0 0
    %178 = vperm.xlu0 %177, %v160
    %v179 = vpop.permute.xlu0 %178
    %v181 = vmul.f32 %v164, %v153
    %v182 = vmul.f32 %v169, %v154
    %v183 = vmul.f32 %v174, %v155
    %v184 = vmul.f32 %v179, %v156
    %v185 = vadd.f32 %v181, %v182
    %v186 = vadd.f32 %v185, %v183
    %v187 = vadd.f32 %v186, %v184
    %v188 = vrot.slane %v187, 4
    %v189 = vadd.f32 %v187, %v188
    %v190 = vrot.slane %v189, 2
    %v191 = vadd.f32 %v189, %v190
    %v192 = vrot.slane %v191, 1
    %v193 = vadd.f32 %v191, %v192
    %s194 = sld [smem:[#allocation2]]
    %v195 = vstv %s194
    %v196 = vadd.f32 %v193, %v195
    %v197 = vxor.u32 %v196, 2147483648
    %v198 = vmul.f32 %v197, 1.442695
    %v199 = vpow.pop %v198
    %v200 = vadd.f32 %v199, 1.0
    %v201 = vrcp.pop %v200
    %v202 = vmul.f32 1.0, %v201
    %v203 = vsub.f32 1.0, %v202
    %204 = vst [vmem:[#allocation3] sm:$0x1] %v203
    %205 = vst [vmem:[#allocation3 + $0x1] sm:$0x1] %v202
    // Predicated region
    $region22: #{tpu_custom_call.1} parent=1 // pred_check
      _
    $region23: #{tpu_custom_call.1} parent=1 // pred_check_branch
      %207 = sbr.rel (0) target = $region25
    $region24: #{tpu_custom_call.1} parent=1 // pred_region
      %s209 = ssub.s32 32, 32
      %210 = vsyncadd [#allocation4], %s209
      %s212 = sshll.u32 [#allocation3], 4
      %s213 = int_to_ptr.vmem [resolvable:$true] %s212
      %215 = dma.vmem_to_hbm [thread:$0]  %s213, 32, %s5, [#allocation4]
    $region25: #{tpu_custom_call.1} parent=1 // pred_fallthru
      _
    // Predicated region
    $region26: #{tpu_custom_call.1} parent=1 // pred_check
      _
    $region27: #{tpu_custom_call.1} parent=1 // pred_check_branch
      %217 = sbr.rel (0) target = $region29
    $region28: #{tpu_custom_call.1} parent=1 // pred_region
      %218 = dma.done [#allocation4], 32
    $region29: #{tpu_custom_call.1} parent=1 // pred_fallthru
      _
    %219 = vsyncpa [#allocation4], 1

</llo_original>
